<compile_context>
chip_gen: v7x
topology: tpu7x:2x2x1
jax: 0.10.0
libtpu: 0.0.40
codegen_flags: <defaults>
</compile_context>

<pallas_src>
import functools

import jax
import jax.numpy as jnp
from jax.experimental import pallas as pl
from jax.experimental.pallas import tpu as pltpu


def _round_up(x, m):
    return ((x + m - 1) // m) * m


# ---------------------------------------------------------------------------
# Phase 1: conv-as-matmul with lane-dense (Cout, thw) output tiles + per-batch
# per-channel sum / sum-of-squares accumulation across HW tiles.
# Grid = (N [parallel], HW tiles [arbitrary]).
# ---------------------------------------------------------------------------
def _conv_stats_kernel(wT_ref, pT_ref, y_ref, s1_ref, s2_ref):
    j = pl.program_id(1)

    # (Cout_pad, K_pad) @ (K_pad, thw) -> (Cout_pad, thw); bf16 MXU operands,
    # f32 accumulate.
    y = jnp.dot(wT_ref[...], pT_ref[0], preferred_element_type=jnp.float32)
    # bf16 intermediate: halves y writeback + phase-2 read traffic (precision
    # already limited by bf16 MXU operands).
    y_ref[0] = y.astype(y_ref.dtype)

    @pl.when(j == 0)
    def _init():
        s1_ref[...] = jnp.zeros_like(s1_ref)
        s2_ref[...] = jnp.zeros_like(s2_ref)

    # Partial sums from the f32 y (zero-padded K / HW columns contribute 0).
    s1_ref[...] += jnp.sum(y, axis=1, keepdims=True)[None]
    s2_ref[...] += jnp.sum(y * y, axis=1, keepdims=True)[None]


# ---------------------------------------------------------------------------
# Phase 2: in-kernel BN finalize (reduce per-batch partials -> mean/var ->
# folded scale/shift) + per-channel PReLU, fully parallel grid.
# ---------------------------------------------------------------------------
def _bn_prelu_kernel(inv_m, eps, s1_ref, s2_ref, params_ref, y_ref, o_ref):
    # Tiny (few-vreg) finalize; rsqrt goes to the EUP slot.
    s1 = jnp.sum(s1_ref[...], axis=0)                # (Cout_pad, 1)
    s2 = jnp.sum(s2_ref[...], axis=0)
    mean = s1 * inv_m
    var = jnp.maximum(s2 * inv_m - mean * mean, 0.0)  # E[y^2]-E[y]^2, clamped
    inv_std = jax.lax.rsqrt(var + eps)

    gamma = params_ref[:, 0:1]
    beta = params_ref[:, 1:2]
    alpha = params_ref[:, 2:3]
    scale = gamma * inv_std                           # (Cout_pad, 1)
    shift = beta - mean * scale

    y = y_ref[0].astype(jnp.float32)                  # (Cout_pad, thw)
    z = y * scale + shift                             # folded BN affine (FMA)
    o_ref[0] = jnp.where(z >= 0, z, alpha * z).astype(o_ref.dtype)


def conv_block_forward(x, weight, gamma, beta, alpha, *, stride, padding,
                       eps=1e-5, linear=False, m_tile=512):
    """ConvBlock forward. x: (N, Cin, H, W); weight: (Cout, Cin, kh, kw)."""
    N, Cin, H, W = x.shape
    Cout, wc_in, kh, kw = weight.shape
    assert wc_in == Cin, "grouped conv not supported"
    # TODO(synk): depthwise (groups=inp) variant.
    Ho = (H + 2 * padding - kh) // stride + 1
    Wo = (W + 2 * padding - kw) // stride + 1
    HW = Ho * Wo
    M = N * HW
    K = kh * kw * Cin

    # ---- glue: bf16 im2col built per-batch in (N, K, HW) layout (tap-major /
    # channel-minor rows) so kernel outputs are lane-dense and already in
    # NCHW order (no output transpose).
    # TODO(synk): replace with in-kernel halo-DMA im2col for large layers.
    x_bf = x.astype(jnp.bfloat16)
    x_pad = jnp.pad(x_bf, ((0, 0), (0, 0), (padding, padding), (padding, padding)))
    taps = []
    for i in range(kh):
        for j in range(kw):
            taps.append(
                x_pad[:, :, i:i + stride * Ho:stride, j:j + stride * Wo:stride])
    # (T, N, Cin, Ho, Wo) -> (N, T, Cin, Ho, Wo) -> (N, K, HW)
    pT = jnp.stack(taps, axis=0).transpose(1, 0, 2, 3, 4).reshape(N, K, HW)

    # (Cout, Cin, kh, kw) -> (Cout, kh, kw, Cin) -> (Cout, K): matches pT rows.
    wT = jnp.transpose(weight.astype(jnp.bfloat16), (0, 2, 3, 1)).reshape(Cout, K)

    # ---- pad to TPU-friendly shapes ----
    K_pad = _round_up(max(K, 1), 128)          # dense contraction dim for MXU
    Cout_pad = _round_up(Cout, 8)              # full sublanes
    thw = min(m_tile, _round_up(HW, 128))      # lane-dense HW tile
    HW_pad = _round_up(HW, thw)
    n_hw = HW_pad // thw

    pT = jnp.pad(pT, ((0, 0), (0, K_pad - K), (0, HW_pad - HW)))
    wT = jnp.pad(wT, ((0, Cout_pad - Cout), (0, K_pad - K)))

    # Explicit scoped-VMEM limit (v5e default is only 16 MiB; v7x physical is
    # 64 MiB total, so stay at/below that).
    vmem_bytes = 64 * 1024 * 1024

    # ---- phase 1: conv matmul + per-batch partial BN statistics ----
    y3d, ysum, ysq = pl.pallas_call(
        _conv_stats_kernel,
        out_shape=(
            jax.ShapeDtypeStruct((N, Cout_pad, HW_pad), jnp.bfloat16),
            jax.ShapeDtypeStruct((N, Cout_pad, 1), jnp.float32),
            jax.ShapeDtypeStruct((N, Cout_pad, 1), jnp.float32),
        ),
        grid=(N, n_hw),
        in_specs=[
            pl.BlockSpec((Cout_pad, K_pad), lambda n, j: (0, 0)),
            pl.BlockSpec((1, K_pad, thw), lambda n, j: (n, 0, j)),
        ],
        out_specs=(
            pl.BlockSpec((1, Cout_pad, thw), lambda n, j: (n, 0, j)),
            pl.BlockSpec((1, Cout_pad, 1), lambda n, j: (n, 0, 0)),
            pl.BlockSpec((1, Cout_pad, 1), lambda n, j: (n, 0, 0)),
        ),
        compiler_params=pltpu.CompilerParams(
            dimension_semantics=("parallel", "arbitrary"),
            vmem_limit_bytes=vmem_bytes),
    )(wT, pT)

    # Small packed per-channel params (gamma, beta, alpha) — single DMA.
    gamma_p = jnp.pad(gamma.astype(jnp.float32), (0, Cout_pad - Cout))
    beta_p = jnp.pad(beta.astype(jnp.float32), (0, Cout_pad - Cout))
    if linear or alpha is None:
        alpha_arr = jnp.ones((Cout,), jnp.float32)   # slope 1 == identity
    else:
        alpha_arr = alpha.astype(jnp.float32)
    alpha_p = jnp.pad(alpha_arr, (0, Cout_pad - Cout))
    params = jnp.stack([gamma_p, beta_p, alpha_p], axis=1)   # (Cout_pad, 3)

    # ---- phase 2: in-kernel BN finalize + folded affine + PReLU ----
    kern2 = functools.partial(_bn_prelu_kernel, 1.0 / float(M), float(eps))
    out3d = pl.pallas_call(
        kern2,
        out_shape=jax.ShapeDtypeStruct((N, Cout_pad, HW_pad), x.dtype),
        grid=(N, n_hw),
        in_specs=[
            pl.BlockSpec((N, Cout_pad, 1), lambda n, j: (0, 0, 0)),
            pl.BlockSpec((N, Cout_pad, 1), lambda n, j: (0, 0, 0)),
            pl.BlockSpec((Cout_pad, 3), lambda n, j: (0, 0)),
            pl.BlockSpec((1, Cout_pad, thw), lambda n, j: (n, 0, j)),
        ],
        out_specs=pl.BlockSpec((1, Cout_pad, thw), lambda n, j: (n, 0, j)),
        compiler_params=pltpu.CompilerParams(
            dimension_semantics=("parallel", "parallel"),
            vmem_limit_bytes=vmem_bytes),
    )(ysum, ysq, params, y3d)

    # Already NCHW-ordered: slice padding off and reshape (no transpose pass).
    return out3d[:, :Cout, :HW].reshape(N, Cout, Ho, Wo)


def _reference_forward(x, weight, gamma, beta, alpha, *, stride, padding,
                       eps=1e-5):
    """Pure-JAX f32 reference (same semantics), used only to check the kernel."""
    y = jax.lax.conv_general_dilated(
        x, weight, window_strides=(stride, stride),
        padding=((padding, padding), (padding, padding)),
        dimension_numbers=("NCHW", "OIHW", "NCHW"))
    mean = jnp.mean(y, axis=(0, 2, 3), keepdims=True)
    var = jnp.mean((y - mean) ** 2, axis=(0, 2, 3), keepdims=True)
    y = (y - mean) / jnp.sqrt(var + eps)
    y = gamma.reshape(1, -1, 1, 1) * y + beta.reshape(1, -1, 1, 1)
    return jnp.where(y >= 0, y, alpha.reshape(1, -1, 1, 1) * y)


if __name__ == "__main__":
    # ConvBlock(inp=4, oup=8, k=3, s=1, p=1, dw=False, linear=False)
    inp, oup, k, s, p = 4, 8, 3, 1, 1
    N, H, W = 2, 16, 16

    key = jax.random.PRNGKey(0)
    kx, kw_ = jax.random.split(key)

    x = jax.random.normal(kx, (N, inp, H, W), dtype=jnp.float32)
    fan_in = inp * k * k
    weight = jax.random.normal(kw_, (oup, inp, k, k), dtype=jnp.float32) \
        * (1.0 / jnp.sqrt(float(fan_in)))
    gamma = jnp.ones((oup,), dtype=jnp.float32)       # BatchNorm2d default init
    beta = jnp.zeros((oup,), dtype=jnp.float32)
    alpha = jnp.full((oup,), 0.25, dtype=jnp.float32)  # PReLU default init

    out = conv_block_forward(x, weight, gamma, beta, alpha, stride=s, padding=p)
    out = jax.block_until_ready(out)

    ref = _reference_forward(x, weight, gamma, beta, alpha, stride=s, padding=p)
    ref = jax.block_until_ready(ref)

    assert out.shape == (N, oup, H, W), out.shape
    # bf16 MXU operands + bf16 intermediate vs pure-f32 reference.
    max_err = float(jnp.max(jnp.abs(out - ref)))
    assert jnp.allclose(out, ref, rtol=5e-2, atol=5e-2), max_err
    print("KERNEL_OK")
</pallas_src>

<mosaic_0001>
module attributes {stable_mosaic.version = 11 : i64} {
  func.func @_conv_stats_kernel(%arg0: i32, %arg1: i32, %arg2: memref<8x128xbf16, #tpu.memory_space<vmem>>, %arg3: memref<1x128x256xbf16, #tpu.memory_space<vmem>>, %arg4: memref<1x8x256xbf16, #tpu.memory_space<vmem>>, %arg5: memref<1x8x1xf32, #tpu.memory_space<vmem>>, %arg6: memref<1x8x1xf32, #tpu.memory_space<vmem>>) attributes {dimension_semantics = [#tpu.dimension_semantics<parallel>, #tpu.dimension_semantics<arbitrary>], iteration_bounds = array<i64: 2, 1>, scalar_prefetch = 0 : i64, scratch_operands = 0 : i64, tpu.core_type = #tpu.core_type<tc>, window_params = [{pipeline_mode = #tpu.pipeline_mode<synchronous>, transform_indices = @transform_0, window_bounds = array<i64: 8, 128>}, {transform_indices = @transform_1, window_bounds = array<i64: 1, 128, 256>}, {transform_indices = @transform_2, window_bounds = array<i64: 1, 8, 256>}, {transform_indices = @transform_3, window_bounds = array<i64: 1, 8, 1>}, {transform_indices = @transform_4, window_bounds = array<i64: 1, 8, 1>}]} {
    %c0 = arith.constant 0 : index
    %c0_0 = arith.constant 0 : index
    %0 = vector.load %arg2[%c0, %c0_0] : memref<8x128xbf16, #tpu.memory_space<vmem>>, vector<8x128xbf16>
    %c0_1 = arith.constant 0 : index
    %c0_2 = arith.constant 0 : index
    %c0_3 = arith.constant 0 : index
    %1 = vector.load %arg3[%c0_1, %c0_2, %c0_3] : memref<1x128x256xbf16, #tpu.memory_space<vmem>>, vector<1x128x256xbf16>
    %2 = vector.shape_cast %1 : vector<1x128x256xbf16> to vector<128x256xbf16>
    %cst = arith.constant dense<0.000000e+00> : vector<8x256xf32>
    %3 = tpu.matmul %0, %2, %cst {dimension_numbers = #tpu.dot_dimension_numbers<[1], [0], [0], [1], [0, 0, 1, 1], [], []>} : vector<8x128xbf16>, vector<128x256xbf16>, vector<8x256xf32> -> vector<8x256xf32>
    %4 = arith.truncf %3 : vector<8x256xf32> to vector<8x256xbf16>
    %c0_4 = arith.constant 0 : index
    %c0_5 = arith.constant 0 : index
    %c0_6 = arith.constant 0 : index
    %5 = vector.load %arg4[%c0_4, %c0_5, %c0_6] : memref<1x8x256xbf16, #tpu.memory_space<vmem>>, vector<1x8x256xbf16>
    %6 = vector.shape_cast %5 : vector<1x8x256xbf16> to vector<8x256xbf16>
    %7 = vector.shape_cast %4 : vector<8x256xbf16> to vector<1x8x256xbf16>
    tpu.vector_store %arg4[%c0_4, %c0_5, %c0_6], %7 {strides = array<i32>} : memref<1x8x256xbf16, #tpu.memory_space<vmem>>, vector<1x8x256xbf16>,
    %c0_i32 = arith.constant 0 : i32
    %8 = arith.cmpi eq, %arg1, %c0_i32 : i32
    %9 = arith.extui %8 : i1 to i32
    %c0_i32_7 = arith.constant 0 : i32
    %10 = arith.cmpi ne, %9, %c0_i32_7 : i32
    scf.if %10 {
      %cst_22 = arith.constant 0.000000e+00 : f32
      %24 = vector.broadcast %cst_22 : f32 to vector<1x8x1xf32>
      %c0_23 = arith.constant 0 : index
      %c0_24 = arith.constant 0 : index
      %c0_25 = arith.constant 0 : index
      %25 = vector.load %arg5[%c0_23, %c0_24, %c0_25] : memref<1x8x1xf32, #tpu.memory_space<vmem>>, vector<1x8x1xf32>
      tpu.vector_store %arg5[%c0_23, %c0_24, %c0_25], %24 {strides = array<i32>} : memref<1x8x1xf32, #tpu.memory_space<vmem>>, vector<1x8x1xf32>,
      %cst_26 = arith.constant 0.000000e+00 : f32
      %26 = vector.broadcast %cst_26 : f32 to vector<1x8x1xf32>
      %c0_27 = arith.constant 0 : index
      %c0_28 = arith.constant 0 : index
      %c0_29 = arith.constant 0 : index
      %27 = vector.load %arg6[%c0_27, %c0_28, %c0_29] : memref<1x8x1xf32, #tpu.memory_space<vmem>>, vector<1x8x1xf32>
      tpu.vector_store %arg6[%c0_27, %c0_28, %c0_29], %26 {strides = array<i32>} : memref<1x8x1xf32, #tpu.memory_space<vmem>>, vector<1x8x1xf32>,
    } else {
    }
    %c0_8 = arith.constant 0 : index
    %c0_9 = arith.constant 0 : index
    %c0_10 = arith.constant 0 : index
    %11 = vector.load %arg5[%c0_8, %c0_9, %c0_10] : memref<1x8x1xf32, #tpu.memory_space<vmem>>, vector<1x8x1xf32>
    %cst_11 = arith.constant dense<0.000000e+00> : vector<8xf32>
    %12 = vector.multi_reduction <add>, %3, %cst_11 [1] : vector<8x256xf32> to vector<8xf32>
    %13 = vector.shape_cast %12 : vector<8xf32> to vector<8x1xf32>
    %14 = vector.shape_cast %13 : vector<8x1xf32> to vector<1x8x1xf32>
    %15 = arith.addf %11, %14 : vector<1x8x1xf32>
    %c0_12 = arith.constant 0 : index
    %c0_13 = arith.constant 0 : index
    %c0_14 = arith.constant 0 : index
    %16 = vector.load %arg5[%c0_12, %c0_13, %c0_14] : memref<1x8x1xf32, #tpu.memory_space<vmem>>, vector<1x8x1xf32>
    tpu.vector_store %arg5[%c0_12, %c0_13, %c0_14], %15 {strides = array<i32>} : memref<1x8x1xf32, #tpu.memory_space<vmem>>, vector<1x8x1xf32>,
    %c0_15 = arith.constant 0 : index
    %c0_16 = arith.constant 0 : index
    %c0_17 = arith.constant 0 : index
    %17 = vector.load %arg6[%c0_15, %c0_16, %c0_17] : memref<1x8x1xf32, #tpu.memory_space<vmem>>, vector<1x8x1xf32>
    %18 = arith.mulf %3, %3 : vector<8x256xf32>
    %cst_18 = arith.constant dense<0.000000e+00> : vector<8xf32>
    %19 = vector.multi_reduction <add>, %18, %cst_18 [1] : vector<8x256xf32> to vector<8xf32>
    %20 = vector.shape_cast %19 : vector<8xf32> to vector<8x1xf32>
    %21 = vector.shape_cast %20 : vector<8x1xf32> to vector<1x8x1xf32>
    %22 = arith.addf %17, %21 : vector<1x8x1xf32>
    %c0_19 = arith.constant 0 : index
    %c0_20 = arith.constant 0 : index
    %c0_21 = arith.constant 0 : index
    %23 = vector.load %arg6[%c0_19, %c0_20, %c0_21] : memref<1x8x1xf32, #tpu.memory_space<vmem>>, vector<1x8x1xf32>
    tpu.vector_store %arg6[%c0_19, %c0_20, %c0_21], %22 {strides = array<i32>} : memref<1x8x1xf32, #tpu.memory_space<vmem>>, vector<1x8x1xf32>,
    return
  }
  func.func @transform_0(%arg0: i32, %arg1: i32) -> (i32, i32) {
    %c0_i32 = arith.constant 0 : i32
    %c0_i32_0 = arith.constant 0 : i32
    %c0_i32_1 = arith.constant 0 : i32
    return %c0_i32, %c0_i32_0 : i32, i32
  }
  func.func @transform_1(%arg0: i32, %arg1: i32) -> (i32, i32, i32) {
    %c0_i32 = arith.constant 0 : i32
    %c0_i32_0 = arith.constant 0 : i32
    return %arg0, %c0_i32, %arg1 : i32, i32, i32
  }
  func.func @transform_2(%arg0: i32, %arg1: i32) -> (i32, i32, i32) {
    %c0_i32 = arith.constant 0 : i32
    %c0_i32_0 = arith.constant 0 : i32
    return %arg0, %c0_i32, %arg1 : i32, i32, i32
  }
  func.func @transform_3(%arg0: i32, %arg1: i32) -> (i32, i32, i32) {
    %c0_i32 = arith.constant 0 : i32
    %c0_i32_0 = arith.constant 0 : i32
    %c0_i32_1 = arith.constant 0 : i32
    return %arg0, %c0_i32, %c0_i32_0 : i32, i32, i32
  }
  func.func @transform_4(%arg0: i32, %arg1: i32) -> (i32, i32, i32) {
    %c0_i32 = arith.constant 0 : i32
    %c0_i32_0 = arith.constant 0 : i32
    %c0_i32_1 = arith.constant 0 : i32
    return %arg0, %c0_i32, %c0_i32_0 : i32, i32, i32
  }
}

</mosaic_0001>

<llo_original>
// kernel: tpu_custom_call.1
$region0: #{tpu_custom_call.1}
  #allocation0 [shape = 'u32[]', space=smem, size = 0x4, offset = 0x4, fixed_abs, tag = 'smem constant byte address 0x4 - core index']
  #allocation1 [shape = 'u32[144,128]{1,0:T(1,128)}', space=vmem, size = 0x12000, scoped, tag = 'internal scratch']
  %s0 = inlined_call_operand.hbm [shape: bf16[8,128], index: 0, kind: input, shape index: {}]
  %s1 = inlined_call_operand.hbm [shape: bf16[2,128,256], index: 1, kind: input, shape index: {}]
  %s2 = inlined_call_operand.hbm [shape: bf16[2,8,256], index: 2, kind: output, shape index: {0}]
  %s3 = inlined_call_operand.hbm [shape: f32[2,8,1], index: 3, kind: output, shape index: {1}]
  %s4 = inlined_call_operand.hbm [shape: f32[2,8,1], index: 4, kind: output, shape index: {2}]
  %5 = xla_tuple %s2, %s3, %s4
  %s6 = sld [smem:[#allocation0]]
  $region69: #{tpu_custom_call.1} parent=0
    _
  %s8 = ssub.s32 1, %s6
  %s9 = scalar_select 0, %s8, %s6
  $region1: #{tpu_custom_call.1} parent=0
    #allocation2 [shape = 'u8[2048]{0}', space=vmem, size = 0x800, scoped, tag = 'input window, operand 0, single buffered']
    #allocation3 [shape = 's32[2]{0}', space=sflag, size = 0x8, scoped, tag = 'scoped memory for tpu_custom_call.1']
    #allocation4 [shape = 's32[2]{0}', space=sflag, size = 0x8, scoped, tag = 'scoped memory for tpu_custom_call.1']
    #allocation5 [shape = 'u8[131072]{0}', space=vmem, size = 0x20000, scoped, tag = 'input window, operand 1']
    #allocation6 [shape = 's32[2]{0}', space=sflag, size = 0x8, scoped, tag = 'scoped memory for tpu_custom_call.1']
    #allocation7 [shape = 'u8[8192]{0}', space=vmem, size = 0x2000, scoped, tag = 'output window, operand 0']
    #allocation8 [shape = 'u8[8192]{0}', space=vmem, size = 0x2000, scoped, tag = 'output window, operand 1']
    #allocation9 [shape = 's32[2]{0}', space=sflag, size = 0x8, scoped, tag = 'scoped memory for tpu_custom_call.1']
    #allocation10 [shape = 'u8[8192]{0}', space=vmem, size = 0x2000, scoped, tag = 'output window, operand 2']
    %10 = vsyncpa [#allocation3], 0
    %11 = vsyncpa [#allocation6], 0
    %s12 = scalar_lea.sflag [#allocation6], 1
    %13 = vsyncpa %s12, 0
    %14 = vsyncpa [#allocation4], 0
    %s15 = scalar_lea.sflag [#allocation4], 1
    %16 = vsyncpa %s15, 0
    %17 = vsyncpa [#allocation9], 0
    %s18 = scalar_lea.sflag [#allocation9], 1
    %19 = vsyncpa %s18, 0
    loop: start=0, step=1, limit=4
    $region2: #{tpu_custom_call.1} parent=1 // loop_pre_header
      _
    $region3: #{tpu_custom_call.1} parent=1 // loop_header
      %s21 = sphi 0, %s25
      %p22 = scmp.ge.s32.totalorder %s21, 4
      %s28 = sphi 0, %s40
      %s29 = sphi 0, %s36
      %s30 = sphi 0, %s28
      %s31 = sphi 0, %s29
      %s32 = sphi 0, %s30
      %s33 = sphi 0, %s31
      %s41 = sphi 0, %s41
      %s43 = sphi 0, %s41
      %s44 = sphi 0, %s43
      %s58 = sphi 0, %s44
      %s66 = sphi 0, %s68
      %s69 = sphi 0, %s66
      %s70 = sphi 0, %s69
      %s86 = sphi 0, %s70
      %s94 = sphi 0, %s96
      %s97 = sphi 0, %s94
      %s98 = sphi 0, %s97
      %s114 = sphi 0, %s98
      %s120 = sphi 0, %s122
      %s123 = sphi 0, %s120
      %s124 = sphi 0, %s123
      %s140 = sphi 0, %s124
      %s146 = sphi 0, %s148
      %s149 = sphi 0, %s146
      %s150 = sphi 0, %s149
      %s166 = sphi 0, %s150
    $region4: #{tpu_custom_call.1} parent=1 // loop_header_branch
      %24 = sbr.rel (%p22) target = $region8
    $region5: #{tpu_custom_call.1} parent=1 // loop_body
      %s26 = ssub.s32 %s21, 1
      %s27 = ssub.s32 %s21, 2
      %s34 = sadd.s32 1, %s29
      %p35 = scmp.ge.s32.totalorder %s34, 1
      %s36 = scalar_select %p35, 0, %s34
      %s37 = sadd.s32 1, %s28
      %s38 = scalar_select %p35, %s37, %s28
      %p39 = scmp.ge.s32.totalorder %s38, 2
      %s40 = scalar_select %p39, 0, %s38
      %s42 = sadd.s32 %s41, 1
      %p45 = scmp.eq.s32.totalorder %s21, 1
      %p46 = scmp.ne.s32.totalorder %s41, %s43
      %p47 = scmp.eq.s32.totalorder %s21, 0
      %p48 = por %p46, %p47
      %p49 = scmp.ne.s32.totalorder %s41, %s43
      %p50 = scmp.eq.s32.totalorder %s26, 1
      %p51 = por %p49, %p50
      %p52 = scmp.ne.s32.totalorder %s43, %s44
      %p53 = scmp.eq.s32.totalorder %s26, 0
      %p54 = por %p52, %p53
      %p55 = scmp.ne.s32.totalorder %s43, %s44
      %p56 = scmp.eq.s32.totalorder %s27, 1
      %p57 = por %p55, %p56
      %p59 = scmp.ne.s32.totalorder %s44, %s58
      %p60 = scmp.eq.s32.totalorder %s27, 0
      %p61 = por %p59, %p60
      %s62 = ssub.s32 %s28, %s40
      %s63 = ssub.s32 %s29, %s36
      %s64 = sor.u32 %s62, %s63
      %p65 = scmp.eq.s32.totalorder %s64, 0
      %s67 = sadd.s32 %s66, 1
      %s68 = scalar_select %p65, %s66, %s67
      %p71 = pneg %p65
      %p72 = scmp.eq.s32.totalorder %s21, 1
      %p73 = por %p71, %p72
      %p74 = scmp.ne.s32.totalorder %s66, %s69
      %p75 = scmp.eq.s32.totalorder %s21, 0
      %p76 = por %p74, %p75
      %p77 = scmp.ne.s32.totalorder %s66, %s69
      %p78 = scmp.eq.s32.totalorder %s26, 1
      %p79 = por %p77, %p78
      %p80 = scmp.ne.s32.totalorder %s69, %s70
      %p81 = scmp.eq.s32.totalorder %s26, 0
      %p82 = por %p80, %p81
      %p83 = scmp.ne.s32.totalorder %s69, %s70
      %p84 = scmp.eq.s32.totalorder %s27, 1
      %p85 = por %p83, %p84
      %p87 = scmp.ne.s32.totalorder %s70, %s86
      %p88 = scmp.eq.s32.totalorder %s27, 0
      %p89 = por %p87, %p88
      %s90 = ssub.s32 %s28, %s40
      %s91 = ssub.s32 %s29, %s36
      %s92 = sor.u32 %s90, %s91
      %p93 = scmp.eq.s32.totalorder %s92, 0
      %s95 = sadd.s32 %s94, 1
      %s96 = scalar_select %p93, %s94, %s95
      %p99 = pneg %p93
      %p100 = scmp.eq.s32.totalorder %s21, 1
      %p101 = por %p99, %p100
      %p102 = scmp.ne.s32.totalorder %s94, %s97
      %p103 = scmp.eq.s32.totalorder %s21, 0
      %p104 = por %p102, %p103
      %p105 = scmp.ne.s32.totalorder %s94, %s97
      %p106 = scmp.eq.s32.totalorder %s26, 1
      %p107 = por %p105, %p106
      %p108 = scmp.ne.s32.totalorder %s97, %s98
      %p109 = scmp.eq.s32.totalorder %s26, 0
      %p110 = por %p108, %p109
      %p111 = scmp.ne.s32.totalorder %s97, %s98
      %p112 = scmp.eq.s32.totalorder %s27, 1
      %p113 = por %p111, %p112
      %p115 = scmp.ne.s32.totalorder %s98, %s114
      %p116 = scmp.eq.s32.totalorder %s27, 0
      %p117 = por %p115, %p116
      %s118 = ssub.s32 %s28, %s40
      %p119 = scmp.eq.s32.totalorder %s118, 0
      %s121 = sadd.s32 %s120, 1
      %s122 = scalar_select %p119, %s120, %s121
      %p125 = pneg %p119
      %p126 = scmp.eq.s32.totalorder %s21, 1
      %p127 = por %p125, %p126
      %p128 = scmp.ne.s32.totalorder %s120, %s123
      %p129 = scmp.eq.s32.totalorder %s21, 0
      %p130 = por %p128, %p129
      %p131 = scmp.ne.s32.totalorder %s120, %s123
      %p132 = scmp.eq.s32.totalorder %s26, 1
      %p133 = por %p131, %p132
      %p134 = scmp.ne.s32.totalorder %s123, %s124
      %p135 = scmp.eq.s32.totalorder %s26, 0
      %p136 = por %p134, %p135
      %p137 = scmp.ne.s32.totalorder %s123, %s124
      %p138 = scmp.eq.s32.totalorder %s27, 1
      %p139 = por %p137, %p138
      %p141 = scmp.ne.s32.totalorder %s124, %s140
      %p142 = scmp.eq.s32.totalorder %s27, 0
      %p143 = por %p141, %p142
      %s144 = ssub.s32 %s28, %s40
      %p145 = scmp.eq.s32.totalorder %s144, 0
      %s147 = sadd.s32 %s146, 1
      %s148 = scalar_select %p145, %s146, %s147
      %p151 = pneg %p145
      %p152 = scmp.eq.s32.totalorder %s21, 1
      %p153 = por %p151, %p152
      %p154 = scmp.ne.s32.totalorder %s146, %s149
      %p155 = scmp.eq.s32.totalorder %s21, 0
      %p156 = por %p154, %p155
      %p157 = scmp.ne.s32.totalorder %s146, %s149
      %p158 = scmp.eq.s32.totalorder %s26, 1
      %p159 = por %p157, %p158
      %p160 = scmp.ne.s32.totalorder %s149, %s150
      %p161 = scmp.eq.s32.totalorder %s26, 0
      %p162 = por %p160, %p161
      %p163 = scmp.ne.s32.totalorder %s149, %s150
      %p164 = scmp.eq.s32.totalorder %s27, 1
      %p165 = por %p163, %p164
      %p167 = scmp.ne.s32.totalorder %s150, %s166
      %p168 = scmp.eq.s32.totalorder %s27, 0
      %p169 = por %p167, %p168
      %p170 = scmp.le.s32.totalorder 1, %s21
      %p171 = scmp.lt.s32.totalorder %s21, 3
      %p172 = pnand %p170, %p171
      %p173 = pneg %p172
      // Predicated region
      $region9: #{tpu_custom_call.1} parent=5 // pred_check
        _
      $region10: #{tpu_custom_call.1} parent=5 // pred_check_branch
        %175 = sbr.rel (%p172) target = $region12
      $region11: #{tpu_custom_call.1} parent=5 // pred_region
        %s176 = ssub.s32 %s21, 1
        // Predicated region
        $region13: #{tpu_custom_call.1} parent=11 // pred_check
          %p177 = pneg %p54
        $region14: #{tpu_custom_call.1} parent=11 // pred_check_branch
          %179 = sbr.rel (%p177) target = $region16
        $region15: #{tpu_custom_call.1} parent=11 // pred_region
          %s181 = ssub.s32 64, 64
          %182 = vsyncadd [#allocation3], %s181
          %s184 = sshll.u32 [#allocation2], 4
          %s185 = int_to_ptr.vmem [resolvable:$true] %s184
          %187 = dma.hbm_to_vmem [thread:$0]  %s0, 64, %s185, [#allocation3]
        $region16: #{tpu_custom_call.1} parent=11 // pred_fallthru
          _
      $region12: #{tpu_custom_call.1} parent=5 // pred_fallthru
        _
      %p188 = scmp.lt.s32.totalorder %s21, 2
      // Predicated region
      $region17: #{tpu_custom_call.1} parent=5 // pred_check
        %p189 = pneg %p188
      $region18: #{tpu_custom_call.1} parent=5 // pred_check_branch
        %191 = sbr.rel (%p189) target = $region20
      $region19: #{tpu_custom_call.1} parent=5 // pred_region
        // Predicated region
        $region21: #{tpu_custom_call.1} parent=19 // pred_check
          %p192 = pneg %p76
        $region22: #{tpu_custom_call.1} parent=19 // pred_check_branch
          %194 = sbr.rel (%p192) target = $region24
        $region23: #{tpu_custom_call.1} parent=19 // pred_region
          %s195 = sand.u32 %s66, 1
          %s196 = scalar_lea.sflag [#allocation6], %s195
          %s197 = sand.u32 %s66, 1
          %s198 = smul.addr %s197, 128
          %s199 = scalar_lea.vmem [#allocation5], %s198
          %s200 = smul.u32 2, %s29
          %s202 = ssub.s32 2048, 2048
          %203 = vsyncadd %s196, %s202
          %s204 = smul.addr %s28, 32
          %s205 = sadd.s32 %s200, %s204
          %s206 = smul.addr %s205, 64
          %s207 = scalar_lea.hbm %s1, %s206
          %s208 = sshll.u32 %s199, 4
          %s209 = int_to_ptr.vmem [resolvable:$true] %s208
          %214 = dma.hbm_to_vmem [thread:$0]  %s207, 2048, %s209, %s196, 128, 128, 8
        $region24: #{tpu_custom_call.1} parent=19 // pred_fallthru
          _
      $region20: #{tpu_custom_call.1} parent=5 // pred_fallthru
        _
      %p215 = scmp.le.s32.totalorder 1, %s21
      %p216 = scmp.lt.s32.totalorder %s21, 3
      %p217 = pnand %p215, %p216
      %p218 = pneg %p217
      // Predicated region
      $region25: #{tpu_custom_call.1} parent=5 // pred_check
        _
      $region26: #{tpu_custom_call.1} parent=5 // pred_check_branch
        %220 = sbr.rel (%p217) target = $region28
      $region27: #{tpu_custom_call.1} parent=5 // pred_region
        %s221 = ssub.s32 %s21, 1
        // Predicated region
        $region29: #{tpu_custom_call.1} parent=27 // pred_check
          %p222 = pneg %p54
        $region30: #{tpu_custom_call.1} parent=27 // pred_check_branch
          %224 = sbr.rel (%p222) target = $region32
        $region31: #{tpu_custom_call.1} parent=27 // pred_region
          %225 = dma.done [#allocation3], 64
        $region32: #{tpu_custom_call.1} parent=27 // pred_fallthru
          _
        %s226 = sand.u32 %s69, 1
        %s227 = scalar_lea.sflag [#allocation6], %s226
        %s228 = sand.u32 %s69, 1
        %s229 = smul.addr %s228, 128
        %s230 = scalar_lea.vmem [#allocation5], %s229
        // Predicated region
        $region33: #{tpu_custom_call.1} parent=27 // pred_check
          %p231 = pneg %p82
        $region34: #{tpu_custom_call.1} parent=27 // pred_check_branch
          %233 = sbr.rel (%p231) target = $region36
        $region35: #{tpu_custom_call.1} parent=27 // pred_region
          %234 = dma.done %s227, 2048
        $region36: #{tpu_custom_call.1} parent=27 // pred_fallthru
          _
        %p235 = pneg %p54
        %p236 = pneg %p51
        %s237 = sand.u32 %s69, 1
        %s238 = scalar_lea.sflag [#allocation6], %s237
        %s239 = sand.u32 %s69, 1
        %s240 = smul.addr %s239, 128
        %s241 = scalar_lea.vmem [#allocation5], %s240
        %p242 = pneg %p82
        %p243 = pneg %p79
        %p244 = pneg %p110
        %p245 = pneg %p107
        %s246 = sand.u32 %s97, 1
        %s247 = scalar_lea.sflag [#allocation4], %s246
        %s248 = sand.u32 %s97, 1
        %s249 = smul.addr %s248, 8
        %s250 = scalar_lea.vmem [#allocation7], %s249
        %p251 = pneg %p136
        %p252 = pneg %p133
        %s253 = sand.u32 %s26, 1
        %s254 = scalar_lea.sflag [#allocation9], %s253
        %s255 = sand.u32 %s123, 1
        %s256 = smul.addr %s255, 8
        %s257 = scalar_lea.vmem [#allocation8], %s256
        %p258 = pneg %p162
        %p259 = pneg %p159
        %s260 = sand.u32 %s26, 1
        %s261 = scalar_lea.sflag [#allocation9], %s260
        %s262 = sand.u32 %s149, 1
        %s263 = smul.addr %s262, 8
        %s264 = scalar_lea.vmem [#allocation10], %s263
        %s265 = smul.u32 2, %s31
        %s266 = smul.u32 2, %s31
        %v268 = vld [vmem:[#allocation2] sm:$0xf]
        %v269 = vld [vmem:[%s230] sm:$0xff]
        %v270 = vld [vmem:[%s230 + $0x8] sm:$0xff]
        %v271 = vld [vmem:[%s230 + $0x10] sm:$0xff]
        %v272 = vld [vmem:[%s230 + $0x18] sm:$0xff]
        %v273 = vld [vmem:[%s230 + $0x20] sm:$0xff]
        %v274 = vld [vmem:[%s230 + $0x28] sm:$0xff]
        %v275 = vld [vmem:[%s230 + $0x30] sm:$0xff]
        %v276 = vld [vmem:[%s230 + $0x38] sm:$0xff]
        %v277 = vld [vmem:[%s230 + $0x40] sm:$0xff]
        %v278 = vld [vmem:[%s230 + $0x48] sm:$0xff]
        %v279 = vld [vmem:[%s230 + $0x50] sm:$0xff]
        %v280 = vld [vmem:[%s230 + $0x58] sm:$0xff]
        %v281 = vld [vmem:[%s230 + $0x60] sm:$0xff]
        %v282 = vld [vmem:[%s230 + $0x68] sm:$0xff]
        %v283 = vld [vmem:[%s230 + $0x70] sm:$0xff]
        %v284 = vld [vmem:[%s230 + $0x78] sm:$0xff]
        %v301 = vunpack.c.l.b16 %v269
        %v302 = vunpack.c.h.b16 %v269
        %v303 = vunpack.c.l.b16 %v270
        %v304 = vunpack.c.h.b16 %v270
        %v305 = vunpack.c.l.b16 %v271
        %v306 = vunpack.c.h.b16 %v271
        %v307 = vunpack.c.l.b16 %v272
        %v308 = vunpack.c.h.b16 %v272
        %v309 = vunpack.c.l.b16 %v273
        %v310 = vunpack.c.h.b16 %v273
        %v311 = vunpack.c.l.b16 %v274
        %v312 = vunpack.c.h.b16 %v274
        %v313 = vunpack.c.l.b16 %v275
        %v314 = vunpack.c.h.b16 %v275
        %v315 = vunpack.c.l.b16 %v276
        %v316 = vunpack.c.h.b16 %v276
        %v317 = vunpack.c.l.b16 %v277
        %v318 = vunpack.c.h.b16 %v277
        %v319 = vunpack.c.l.b16 %v278
        %v320 = vunpack.c.h.b16 %v278
        %v321 = vunpack.c.l.b16 %v279
        %v322 = vunpack.c.h.b16 %v279
        %v323 = vunpack.c.l.b16 %v280
        %v324 = vunpack.c.h.b16 %v280
        %v325 = vunpack.c.l.b16 %v281
        %v326 = vunpack.c.h.b16 %v281
        %v327 = vunpack.c.l.b16 %v282
        %v328 = vunpack.c.h.b16 %v282
        %v329 = vunpack.c.l.b16 %v283
        %v330 = vunpack.c.h.b16 %v283
        %v331 = vunpack.c.l.b16 %v284
        %v332 = vunpack.c.h.b16 %v284
        %v333 = vpack.c.b16 %v303, %v301
        %v334 = vpack.c.b16 %v304, %v302
        %v335 = vpack.c.b16 %v307, %v305
        %v336 = vpack.c.b16 %v308, %v306
        %v337 = vpack.c.b16 %v311, %v309
        %v338 = vpack.c.b16 %v312, %v310
        %v339 = vpack.c.b16 %v315, %v313
        %v340 = vpack.c.b16 %v316, %v314
        %v341 = vpack.c.b16 %v319, %v317
        %v342 = vpack.c.b16 %v320, %v318
        %v343 = vpack.c.b16 %v323, %v321
        %v344 = vpack.c.b16 %v324, %v322
        %v345 = vpack.c.b16 %v327, %v325
        %v346 = vpack.c.b16 %v328, %v326
        %v347 = vpack.c.b16 %v331, %v329
        %v348 = vpack.c.b16 %v332, %v330
        %365 = vmatprep.subr.bf16.mxu0 %v334
        %366 = vmatpush1.bf16.msra.mxu0 %v333
        %367 = vmatprep.subr.bf16.mxu0 %v336
        %368 = vmatpush1.bf16.msra.mxu0 %v335
        %369 = vmatprep.subr.bf16.mxu0 %v338
        %370 = vmatpush1.bf16.msra.mxu0 %v337
        %371 = vmatprep.subr.bf16.mxu0 %v340
        %372 = vmatpush1.bf16.msra.mxu0 %v339
        %373 = vmatprep.subr.bf16.mxu0 %v342
        %374 = vmatpush1.bf16.msra.mxu0 %v341
        %375 = vmatprep.subr.bf16.mxu0 %v344
        %376 = vmatpush1.bf16.msra.mxu0 %v343
        %377 = vmatprep.subr.bf16.mxu0 %v346
        %378 = vmatpush1.bf16.msra.mxu0 %v345
        %379 = vmatprep.subr.bf16.mxu0 %v348
        %380 = vmatpush1.bf16.msra.mxu0 %v347
        %381 = vmatprep.subr.bf16.mxu0 0
        %382 = vmatpush1.bf16.msra.mxu0 0
        %383 = vmatprep.subr.bf16.mxu0 0
        %384 = vmatpush1.bf16.msra.mxu0 0
        %385 = vmatprep.subr.bf16.mxu0 0
        %386 = vmatpush1.bf16.msra.mxu0 0
        %387 = vmatprep.subr.bf16.mxu0 0
        %388 = vmatpush1.bf16.msra.mxu0 0
        %389 = vmatprep.subr.bf16.mxu0 0
        %390 = vmatpush1.bf16.msra.mxu0 0
        %391 = vmatprep.subr.bf16.mxu0 0
        %392 = vmatpush1.bf16.msra.mxu0 0
        %393 = vmatprep.subr.bf16.mxu0 0
        %394 = vmatpush1.bf16.msra.mxu0 0
        %395 = vmatprep.subr.bf16.mxu0 0
        %396 = vmatpush1.bf16.msra.mxu0 0
        %397 = vmatprep.mubr.bf16.mxu0 0
        %398 = vmatmul.mubr.bf16.gmra.mrb[0].mxu0 %v268
        %v399 = vpop.f32.mrb[0].mxu0
        %v400 = vadd.f32 0.0, %v399
        %v401 = vpop.f32.mrb[0].mxu0
        %v402 = vadd.f32 0.0, %v401
        %v403 = vpop.f32.mrb[0].mxu0
        %v404 = vpop.f32.mrb[0].mxu0
        %405 = vdwg.mxu0
        %v406 = vpack.c.bf16 %v400, %v400
        %v407 = vpack.c.bf16 %v402, %v402
        %v410 = vunpack.c.l.b16 %v406
        %v411 = vunpack.c.l.b16 %v407
        %v412 = vpack.c.b16 %v411, %v410
        %414 = vst [vmem:[%s250] sm:$0xff] %v412
        %p415 = scmp.eq.s32.totalorder %s31, 0
        // Predicated region
        $region37: #{tpu_custom_call.1} parent=27 // pred_check
          %p416 = pneg %p415
        $region38: #{tpu_custom_call.1} parent=27 // pred_check_branch
          %418 = sbr.rel (%p416) target = $region40
        $region39: #{tpu_custom_call.1} parent=27 // pred_region
          %vm419 = vcmask 7168
          %420 = vst.msk [vmem:[%s257] sm:$0xff] %vm419, 0.0
          %421 = vst.msk [vmem:[%s264] sm:$0xff] %vm419, 0.0
        $region40: #{tpu_custom_call.1} parent=27 // pred_fallthru
          _
        %v422 = vld [vmem:[%s257] sm:$0xff]
        %v423 = vadd.f32 %v400, %v402
        %424 = vadd.xlane.f32.xlu0 %v423
        %v425 = vpop.xlane.xlu0 %424
        %v426 = vadd.f32 %v422, %v425
        %vm427 = vcmask 7168
        %428 = vst.msk [vmem:[%s257] sm:$0xff] %vm427, %v426
        %v429 = vld [vmem:[%s264] sm:$0xff]
        %v430 = vmul.f32 %v400, %v400
        %v431 = vmul.f32 %v402, %v402
        %v432 = vadd.f32 %v430, %v431
        %433 = vadd.xlane.f32.xlu0 %v432
        %v434 = vpop.xlane.xlu0 %433
        %v435 = vadd.f32 %v429, %v434
        %436 = vst.msk [vmem:[%s264] sm:$0xff] %vm427, %v435
        %s437 = sand.u32 %s97, 1
        %s438 = scalar_lea.sflag [#allocation4], %s437
        %s439 = sand.u32 %s97, 1
        %s440 = smul.addr %s439, 8
        %s441 = scalar_lea.vmem [#allocation7], %s440
        %s442 = sand.u32 %s26, 1
        %s443 = scalar_lea.sflag [#allocation9], %s442
        %s444 = sand.u32 %s123, 1
        %s445 = smul.addr %s444, 8
        %s446 = scalar_lea.vmem [#allocation8], %s445
        %s447 = sand.u32 %s26, 1
        %s448 = scalar_lea.sflag [#allocation9], %s447
        %s449 = sand.u32 %s149, 1
        %s450 = smul.addr %s449, 8
        %s451 = scalar_lea.vmem [#allocation10], %s450
        // Predicated region
        $region41: #{tpu_custom_call.1} parent=27 // pred_check
          %p452 = pneg %p107
        $region42: #{tpu_custom_call.1} parent=27 // pred_check_branch
          %454 = sbr.rel (%p452) target = $region44
        $region43: #{tpu_custom_call.1} parent=27 // pred_region
          %s455 = smul.u32 2, %s31
          %s457 = ssub.s32 128, 128
          %458 = vsyncadd %s438, %s457
          %s459 = smul.addr %s30, 2
          %s460 = sadd.s32 %s455, %s459
          %s461 = smul.addr %s460, 64
          %s462 = scalar_lea.hbm %s2, %s461
          %s464 = sshll.u32 %s441, 4
          %s465 = int_to_ptr.vmem [resolvable:$true] %s464
          %467 = dma.vmem_to_hbm [thread:$0]  %s465, 128, %s462, %s438
        $region44: #{tpu_custom_call.1} parent=27 // pred_fallthru
          _
        // Predicated region
        $region45: #{tpu_custom_call.1} parent=27 // pred_check
          %p468 = pneg %p133
        $region46: #{tpu_custom_call.1} parent=27 // pred_check_branch
          %470 = sbr.rel (%p468) target = $region48
        $region47: #{tpu_custom_call.1} parent=27 // pred_region
          %s472 = ssub.s32 128, 128
          %473 = vsyncadd %s443, %s472
          %s474 = smul.addr %s30, 128
          %s475 = scalar_lea.hbm %s3, %s474
          %s477 = sshll.u32 %s446, 4
          %s478 = int_to_ptr.vmem [resolvable:$true] %s477
          %480 = dma.vmem_to_hbm [thread:$0]  %s478, 128, %s475, %s443
        $region48: #{tpu_custom_call.1} parent=27 // pred_fallthru
          _
        // Predicated region
        $region49: #{tpu_custom_call.1} parent=27 // pred_check
          %p481 = pneg %p159
        $region50: #{tpu_custom_call.1} parent=27 // pred_check_branch
          %483 = sbr.rel (%p481) target = $region52
        $region51: #{tpu_custom_call.1} parent=27 // pred_region
          %s485 = ssub.s32 128, 128
          %486 = vsyncadd %s448, %s485
          %s487 = smul.addr %s30, 128
          %s488 = scalar_lea.hbm %s4, %s487
          %s490 = sshll.u32 %s451, 4
          %s491 = int_to_ptr.vmem [resolvable:$true] %s490
          %493 = dma.vmem_to_hbm [thread:$0]  %s491, 128, %s488, %s448
        $region52: #{tpu_custom_call.1} parent=27 // pred_fallthru
          _
      $region28: #{tpu_custom_call.1} parent=5 // pred_fallthru
        _
      %p494 = scmp.le.s32.totalorder 2, %s21
      // Predicated region
      $region53: #{tpu_custom_call.1} parent=5 // pred_check
        %p495 = pneg %p494
      $region54: #{tpu_custom_call.1} parent=5 // pred_check_branch
        %497 = sbr.rel (%p495) target = $region56
      $region55: #{tpu_custom_call.1} parent=5 // pred_region
        %s498 = ssub.s32 %s21, 2
        // Predicated region
        $region57: #{tpu_custom_call.1} parent=55 // pred_check
          %p499 = pneg %p113
        $region58: #{tpu_custom_call.1} parent=55 // pred_check_branch
          %501 = sbr.rel (%p499) target = $region60
        $region59: #{tpu_custom_call.1} parent=55 // pred_region
          %s502 = sand.u32 %s98, 1
          %s503 = scalar_lea.sflag [#allocation4], %s502
          %s504 = sand.u32 %s98, 1
          %s505 = smul.addr %s504, 8
          %s506 = scalar_lea.vmem [#allocation7], %s505
          %507 = dma.done %s503, 128
        $region60: #{tpu_custom_call.1} parent=55 // pred_fallthru
          _
        // Predicated region
        $region61: #{tpu_custom_call.1} parent=55 // pred_check
          %p508 = pneg %p139
        $region62: #{tpu_custom_call.1} parent=55 // pred_check_branch
          %510 = sbr.rel (%p508) target = $region64
        $region63: #{tpu_custom_call.1} parent=55 // pred_region
          %s511 = sand.u32 %s27, 1
          %s512 = scalar_lea.sflag [#allocation9], %s511
          %s513 = sand.u32 %s124, 1
          %s514 = smul.addr %s513, 8
          %s515 = scalar_lea.vmem [#allocation8], %s514
          %516 = dma.done %s512, 128
        $region64: #{tpu_custom_call.1} parent=55 // pred_fallthru
          _
        // Predicated region
        $region65: #{tpu_custom_call.1} parent=55 // pred_check
          %p517 = pneg %p165
        $region66: #{tpu_custom_call.1} parent=55 // pred_check_branch
          %519 = sbr.rel (%p517) target = $region68
        $region67: #{tpu_custom_call.1} parent=55 // pred_region
          %s520 = sand.u32 %s27, 1
          %s521 = scalar_lea.sflag [#allocation9], %s520
          %s522 = sand.u32 %s150, 1
          %s523 = smul.addr %s522, 8
          %s524 = scalar_lea.vmem [#allocation10], %s523
          %525 = dma.done %s521, 128
        $region68: #{tpu_custom_call.1} parent=55 // pred_fallthru
          _
      $region56: #{tpu_custom_call.1} parent=5 // pred_fallthru
        _
    $region6: #{tpu_custom_call.1} parent=1 // loop_footer
      %s25 = sadd.s32 1, %s21
    $region7: #{tpu_custom_call.1} parent=1 // loop_footer_branch
      %20 = sbr.rel target = $region3
    $region8: #{tpu_custom_call.1} parent=1 // loop_exit
      _
    %526 = vsyncpa [#allocation3], 1
    %s527 = scalar_lea.sflag [#allocation3], 1
    %528 = vsyncpa %s527, 1
    %529 = vsyncpa [#allocation6], 1
    %s530 = scalar_lea.sflag [#allocation6], 1
    %531 = vsyncpa %s530, 1
    %532 = vsyncpa [#allocation4], 1
    %s533 = scalar_lea.sflag [#allocation4], 1
    %534 = vsyncpa %s533, 1
    %535 = vsyncpa [#allocation9], 1
    %s536 = scalar_lea.sflag [#allocation9], 1
    %537 = vsyncpa %s536, 1

</llo_original>
